<compile_context>
chip_gen: v7x
topology: tpu7x:2x2x1
jax: 0.10.0
libtpu: 0.0.40
codegen_flags: <defaults>
</compile_context>

<pallas_src>
import functools

import jax
import jax.numpy as jnp
from jax import lax
from jax.experimental import pallas as pl
from jax.experimental.pallas import tpu as pltpu


def _round_up(x, m):
    return ((x + m - 1) // m) * m


def _vmem_capacity_bytes():
    """Physical VMEM per TensorCore (128 MiB on v5e/v6e, 64 MiB on v7x)."""
    try:
        cap = getattr(pltpu.get_tpu_info(), "vmem_capacity_bytes", None)
        if cap:
            return int(cap)
    except Exception:
        pass
    try:
        kind = jax.devices()[0].device_kind.lower()
    except Exception:
        kind = ""
    if "v7" in kind or "tpu7" in kind:
        return 64 * 1024 * 1024
    return 128 * 1024 * 1024


# ----------------------------------------------------------------------------
# Kernels
# ----------------------------------------------------------------------------

def _softmax_ce_resident_kernel(x_ref, w_ref, b_ref, y_ref, logits_ref, nll_ref,
                                *, c_valid, c_padded):
    # x_ref:(TM,E) f32  w_ref:(E,Cp) bf16  b_ref:(1,Cp) f32  y_ref:(TM,1) i32
    # logits_ref:(TM,Cp) f32  nll_ref:(TM,1) f32
    x = x_ref[...].astype(jnp.bfloat16)                   # VPU cast feeding the MXU
    logits = jnp.dot(x, w_ref[...], preferred_element_type=jnp.float32)
    logits = logits + b_ref[...]                          # f32 bias add
    logits_ref[...] = logits                              # lane-dense f32 store

    tm = logits.shape[0]
    class_ids = lax.broadcasted_iota(jnp.int32, (tm, c_padded), 1)

    if c_valid != c_padded:                               # static: skip when 128-aligned
        masked = jnp.where(class_ids < c_valid, logits, -jnp.inf)
    else:
        masked = logits

    m = jnp.max(masked, axis=-1, keepdims=True)
    lse = m + jnp.log(jnp.sum(jnp.exp(masked - m), axis=-1, keepdims=True))

    # Fused one-hot gather: single select + row-sum (targets always < c_valid).
    target_logit = jnp.sum(jnp.where(class_ids == y_ref[...], logits, 0.0),
                           axis=-1, keepdims=True)
    nll_ref[...] = lse - target_logit


def _softmax_ce_tiled_kernel(x_ref, w_ref, b_ref, y_ref, logits_ref, nll_ref,
                             m_sc, l_sc, t_sc, *, c_valid, c_padded):
    # grid = (batch tiles, class tiles); class axis is innermost ("arbitrary").
    j = pl.program_id(1)

    @pl.when(j == 0)
    def _init():
        m_sc[...] = jnp.full(m_sc.shape, -jnp.inf, dtype=m_sc.dtype)
        l_sc[...] = jnp.zeros(l_sc.shape, dtype=l_sc.dtype)
        t_sc[...] = jnp.zeros(t_sc.shape, dtype=t_sc.dtype)

    x = x_ref[...].astype(jnp.bfloat16)
    logits = jnp.dot(x, w_ref[...], preferred_element_type=jnp.float32)
    logits = logits + b_ref[...]
    logits_ref[...] = logits

    tm, tn = logits.shape
    class_ids = j * tn + lax.broadcasted_iota(jnp.int32, (tm, tn), 1)

    if c_valid != c_padded:
        masked = jnp.where(class_ids < c_valid, logits, -jnp.inf)
    else:
        masked = logits

    # Online logsumexp across class tiles.
    m_new = jnp.maximum(m_sc[...], jnp.max(masked, axis=-1, keepdims=True))
    alpha = jnp.exp(m_sc[...] - m_new)
    l_sc[...] = alpha * l_sc[...] + jnp.sum(jnp.exp(masked - m_new), axis=-1,
                                            keepdims=True)
    m_sc[...] = m_new
    t_sc[...] += jnp.sum(jnp.where(class_ids == y_ref[...], logits, 0.0),
                         axis=-1, keepdims=True)

    @pl.when(j == pl.num_programs(1) - 1)
    def _finalize():
        nll_ref[...] = m_sc[...] + jnp.log(l_sc[...]) - t_sc[...]


# ----------------------------------------------------------------------------
# pallas_call wrappers
# ----------------------------------------------------------------------------

def _resident_call(x_p, w_p, b_p, y_p, *, tm, cp, c_valid, bp, e, vmem_limit,
                   single_buffer_resident):
    if single_buffer_resident:
        # Constant index_map -> fetched once; single-buffer to halve its footprint.
        w_spec = pl.BlockSpec((e, cp), lambda i: (0, 0), pipeline_mode=pl.Buffered(1))
        b_spec = pl.BlockSpec((1, cp), lambda i: (0, 0), pipeline_mode=pl.Buffered(1))
    else:
        w_spec = pl.BlockSpec((e, cp), lambda i: (0, 0))
        b_spec = pl.BlockSpec((1, cp), lambda i: (0, 0))
    kernel = functools.partial(_softmax_ce_resident_kernel,
                               c_valid=c_valid, c_padded=cp)
    return pl.pallas_call(
        kernel,
        out_shape=(
            jax.ShapeDtypeStruct((bp, cp), jnp.float32),   # padded logits
            jax.ShapeDtypeStruct((bp, 1), jnp.float32),    # per-row NLL
        ),
        grid=(bp // tm,),
        in_specs=[
            pl.BlockSpec((tm, e), lambda i: (i, 0)),       # x tile (f32), pipelined
            w_spec,                                        # weight, VMEM-resident
            b_spec,                                        # bias, VMEM-resident
            pl.BlockSpec((tm, 1), lambda i: (i, 0)),       # targets tile
        ],
        out_specs=(
            pl.BlockSpec((tm, cp), lambda i: (i, 0)),      # lane-dense f32 logits tile
            pl.BlockSpec((tm, 1), lambda i: (i, 0)),       # per-row NLL tile
        ),
        compiler_params=pltpu.CompilerParams(
            dimension_semantics=("parallel",),             # v7x shards batch tiles
            vmem_limit_bytes=vmem_limit,
        ),
    )(x_p, w_p, b_p, y_p)


def _class_tiled_call(x_p, w_p, b_p, y_p, *, tm, tn, cp, c_valid, bp, e, vmem_limit):
    kernel = functools.partial(_softmax_ce_tiled_kernel,
                               c_valid=c_valid, c_padded=cp)
    return pl.pallas_call(
        kernel,
        out_shape=(
            jax.ShapeDtypeStruct((bp, cp), jnp.float32),
            jax.ShapeDtypeStruct((bp, 1), jnp.float32),
        ),
        grid=(bp // tm, cp // tn),
        in_specs=[
            pl.BlockSpec((tm, e), lambda i, j: (i, 0)),    # x tile, constant across j
            pl.BlockSpec((e, tn), lambda i, j: (0, j)),    # streaming weight columns
            pl.BlockSpec((1, tn), lambda i, j: (0, j)),    # streaming bias columns
            pl.BlockSpec((tm, 1), lambda i, j: (i, 0)),    # targets tile
        ],
        out_specs=(
            pl.BlockSpec((tm, tn), lambda i, j: (i, j)),   # logits tile
            pl.BlockSpec((tm, 1), lambda i, j: (i, 0)),    # NLL, written at last j
        ),
        scratch_shapes=[
            pltpu.VMEM((tm, 1), jnp.float32),              # running max
            pltpu.VMEM((tm, 1), jnp.float32),              # running sum-of-exp
            pltpu.VMEM((tm, 1), jnp.float32),              # accumulated target logit
        ],
        compiler_params=pltpu.CompilerParams(
            dimension_semantics=("parallel", "arbitrary"),
            vmem_limit_bytes=vmem_limit,
        ),
    )(x_p, w_p, b_p, y_p)


# ----------------------------------------------------------------------------
# Public forward
# ----------------------------------------------------------------------------

def softmax_forward(x, weight, bias, y, *, tm=None, tn=None, force_class_tiled=False):
    """x: (B, E) f32, weight: (C, E) f32, bias: (C,) f32, y: (B,) int.

    Returns (logits (B, C) f32, loss () f32), matching SoftMax.forward.
    """
    x = x.astype(jnp.float32)
    B, E = x.shape
    C = weight.shape[0]
    cp = _round_up(C, 128)                       # lane-dense padded class dim

    # Per-generation VMEM budget (per TensorCore, so v7x's replication of the
    # resident weight on both TCs is handled automatically).
    cap = _vmem_capacity_bytes()                 # 128 MiB (v5e/v6e) / 64 MiB (v7x)
    vmem_limit = int(cap * 0.8)                  # ~102 MiB / ~51 MiB scoped limit
    budget = vmem_limit - (4 << 20)              # headroom for compiler scratch

    # Weight / bias prep (one small pad+transpose+cast; x stays f32, no HBM pass).
    w_bf = weight.astype(jnp.bfloat16).T         # (E, C) bf16
    if cp != C:
        w_p = jnp.zeros((E, cp), jnp.bfloat16).at[:, :C].set(w_bf)
        b_p = jnp.zeros((1, cp), jnp.float32).at[0, :C].set(bias.astype(jnp.float32))
    else:
        w_p = w_bf
        b_p = bias.astype(jnp.float32).reshape(1, C)

    bp_full = _round_up(B, 8)

    # Choose weight-resident vs class-tiled path from the VMEM budget.
    weight_bytes = E * cp * 2 + cp * 4           # single-buffered resident W + bias
    per_row = 16 * cp + 8 * E + 2048             # dbl-buffered f32 logits tile + temp,
                                                 # dbl-buffered f32 x tile, y/nll lanes
    tm_fit = (budget - weight_bytes) // per_row
    use_class_tiled = force_class_tiled or tm_fit < 8

    if not use_class_tiled:
        if tm is None:
            tm = min(tm_fit, 1024, bp_full)
            if bp_full >= 16:                    # >= 2 grid steps -> v7x megacore
                tm = min(tm, _round_up((B + 1) // 2, 8))
        tm = max(8, (min(tm, bp_full) // 8) * 8)
    else:
        if tm is None:
            tm = min(256, bp_full)
        tm = max(8, (min(tm, bp_full) // 8) * 8)
        if tn is None:
            fixed = 8 * tm * E + (64 << 10)      # dbl-buffered f32 x + scratch/nll/y
            per_col = 4 * E + 12 * tm + 8        # dbl bf16 W col + dbl f32 logits + temp
            tn = (budget - fixed) // per_col
        tn = max(128, min((tn // 128) * 128, cp))
        while cp % tn:                           # tn must divide the padded class dim
            tn -= 128

    bp = _round_up(B, tm)

    if bp != B:
        x_p = jnp.zeros((bp, E), jnp.float32).at[:B].set(x)
        y_p = jnp.zeros((bp, 1), jnp.int32).at[:B, 0].set(y.astype(jnp.int32))
    else:
        x_p = x
        y_p = y.astype(jnp.int32).reshape(B, 1)

    if use_class_tiled:
        logits_p, nll = _class_tiled_call(
            x_p, w_p, b_p, y_p, tm=tm, tn=tn, cp=cp, c_valid=C, bp=bp, e=E,
            vmem_limit=vmem_limit)
    else:
        try:
            logits_p, nll = _resident_call(
                x_p, w_p, b_p, y_p, tm=tm, cp=cp, c_valid=C, bp=bp, e=E,
                vmem_limit=vmem_limit, single_buffer_resident=True)
        except Exception:
            # Fallback for jax versions without pipeline_mode support on pallas_call.
            logits_p, nll = _resident_call(
                x_p, w_p, b_p, y_p, tm=tm, cp=cp, c_valid=C, bp=bp, e=E,
                vmem_limit=vmem_limit, single_buffer_resident=False)

    logits = logits_p[:B, :C]
    loss = jnp.mean(nll[:B, 0])                  # tiny wrapper-side reduce
    return logits, loss


# ----------------------------------------------------------------------------
# Self-test
# ----------------------------------------------------------------------------

if __name__ == "__main__":
    def reference(x, weight, bias, y):
        # Same bf16 operand rounding as the MXU path, f32 accumulate.
        xb = x.astype(jnp.bfloat16).astype(jnp.float32)
        wb = weight.astype(jnp.bfloat16).astype(jnp.float32)
        ref_logits = xb @ wb.T + bias
        ref_loss = jnp.mean(
            jax.nn.logsumexp(ref_logits, axis=-1)
            - jnp.take_along_axis(ref_logits, y[:, None], axis=-1)[:, 0])
        return ref_logits, ref_loss

    # 1) Default (weight-resident) path: embed_size=32, num_class=16, batch=8.
    B, E, C = 8, 32, 16
    kx, kw, kb, ky = jax.random.split(jax.random.PRNGKey(0), 4)
    x = jax.random.normal(kx, (B, E), dtype=jnp.float32)
    bound = 1.0 / (E ** 0.5)                     # nn.Linear-style uniform init
    weight = jax.random.uniform(kw, (C, E), minval=-bound, maxval=bound,
                                dtype=jnp.float32)
    bias = jax.random.uniform(kb, (C,), minval=-bound, maxval=bound,
                              dtype=jnp.float32)
    y = jax.random.randint(ky, (B,), 0, C, dtype=jnp.int32)

    logits, loss = softmax_forward(x, weight, bias, y)
    jax.block_until_ready((logits, loss))

    ref_logits, ref_loss = reference(x, weight, bias, y)
    assert logits.shape == (B, C)
    assert jnp.allclose(logits, ref_logits, atol=1e-3, rtol=1e-3)
    assert jnp.allclose(loss, ref_loss, atol=1e-3, rtol=1e-3)

    # 2) Class-tiled (online-logsumexp) path, forced at small shapes to exercise
    #    the vocab-scale fallback (Cp=256 -> 2 class tiles, 2 batch tiles).
    B2, E2, C2 = 16, 32, 200
    kx2, kw2, kb2, ky2 = jax.random.split(jax.random.PRNGKey(1), 4)
    x2 = jax.random.normal(kx2, (B2, E2), dtype=jnp.float32)
    bound2 = 1.0 / (E2 ** 0.5)
    w2 = jax.random.uniform(kw2, (C2, E2), minval=-bound2, maxval=bound2,
                            dtype=jnp.float32)
    bias2 = jax.random.uniform(kb2, (C2,), minval=-bound2, maxval=bound2,
                               dtype=jnp.float32)
    y2 = jax.random.randint(ky2, (B2,), 0, C2, dtype=jnp.int32)

    logits2, loss2 = softmax_forward(x2, w2, bias2, y2,
                                     tm=8, tn=128, force_class_tiled=True)
    jax.block_until_ready((logits2, loss2))

    ref_logits2, ref_loss2 = reference(x2, w2, bias2, y2)
    assert logits2.shape == (B2, C2)
    assert jnp.allclose(logits2, ref_logits2, atol=1e-3, rtol=1e-3)
    assert jnp.allclose(loss2, ref_loss2, atol=1e-3, rtol=1e-3)

    print("KERNEL_OK")
</pallas_src>

<mosaic_0001>
module attributes {stable_mosaic.version = 11 : i64} {
  func.func @_softmax_ce_resident_kernel(%arg0: i32, %arg1: memref<8x32xf32, #tpu.memory_space<vmem>>, %arg2: memref<32x128xbf16, #tpu.memory_space<vmem>>, %arg3: memref<1x128xf32, #tpu.memory_space<vmem>>, %arg4: memref<8x1xi32, #tpu.memory_space<vmem>>, %arg5: memref<8x128xf32, #tpu.memory_space<vmem>>, %arg6: memref<8x1xf32, #tpu.memory_space<vmem>>) attributes {dimension_semantics = [#tpu.dimension_semantics<parallel>], iteration_bounds = array<i64: 1>, scalar_prefetch = 0 : i64, scratch_operands = 0 : i64, tpu.core_type = #tpu.core_type<tc>, window_params = [{transform_indices = @transform_0, window_bounds = array<i64: 8, 32>}, {pipeline_mode = #tpu.pipeline_mode<synchronous>, transform_indices = @transform_1, window_bounds = array<i64: 32, 128>}, {pipeline_mode = #tpu.pipeline_mode<synchronous>, transform_indices = @transform_2, window_bounds = array<i64: 1, 128>}, {transform_indices = @transform_3, window_bounds = array<i64: 8, 1>}, {transform_indices = @transform_4, window_bounds = array<i64: 8, 128>}, {transform_indices = @transform_5, window_bounds = array<i64: 8, 1>}]} {
    %c0 = arith.constant 0 : index
    %c0_0 = arith.constant 0 : index
    %0 = vector.load %arg1[%c0, %c0_0] : memref<8x32xf32, #tpu.memory_space<vmem>>, vector<8x32xf32>
    %1 = arith.truncf %0 : vector<8x32xf32> to vector<8x32xbf16>
    %c0_1 = arith.constant 0 : index
    %c0_2 = arith.constant 0 : index
    %2 = vector.load %arg2[%c0_1, %c0_2] : memref<32x128xbf16, #tpu.memory_space<vmem>>, vector<32x128xbf16>
    %cst = arith.constant dense<0.000000e+00> : vector<8x128xf32>
    %3 = tpu.matmul %1, %2, %cst {dimension_numbers = #tpu.dot_dimension_numbers<[1], [0], [0], [1], [0, 0, 1, 1], [], []>} : vector<8x32xbf16>, vector<32x128xbf16>, vector<8x128xf32> -> vector<8x128xf32>
    %c0_3 = arith.constant 0 : index
    %c0_4 = arith.constant 0 : index
    %4 = vector.load %arg3[%c0_3, %c0_4] : memref<1x128xf32, #tpu.memory_space<vmem>>, vector<1x128xf32>
    %5 = vector.broadcast %4 : vector<1x128xf32> to vector<8x128xf32>
    %6 = arith.addf %3, %5 : vector<8x128xf32>
    %c0_5 = arith.constant 0 : index
    %c0_6 = arith.constant 0 : index
    %7 = vector.load %arg5[%c0_5, %c0_6] : memref<8x128xf32, #tpu.memory_space<vmem>>, vector<8x128xf32>
    tpu.vector_store %arg5[%c0_5, %c0_6], %6 {strides = array<i32>} : memref<8x128xf32, #tpu.memory_space<vmem>>, vector<8x128xf32>,
    %8 = tpu.iota {dimensions = array<i32: 1>} : vector<8x128xi32>
    %c16_i32 = arith.constant 16 : i32
    %9 = vector.broadcast %c16_i32 : i32 to vector<8x128xi32>
    %10 = arith.cmpi slt, %8, %9 : vector<8x128xi32>
    %cst_7 = arith.constant 0xFF800000 : f32
    %11 = vector.broadcast %cst_7 : f32 to vector<8x128xf32>
    %12 = arith.select %10, %6, %11 : vector<8x128xi1>, vector<8x128xf32>
    %cst_8 = arith.constant dense<0xFF800000> : vector<8xf32>
    %13 = vector.multi_reduction <maximumf>, %12, %cst_8 [1] : vector<8x128xf32> to vector<8xf32>
    %14 = vector.shape_cast %13 : vector<8xf32> to vector<8x1xf32>
    %15 = vector.broadcast %14 : vector<8x1xf32> to vector<8x128xf32>
    %16 = arith.subf %12, %15 : vector<8x128xf32>
    %17 = math.exp %16 : vector<8x128xf32>
    %cst_9 = arith.constant dense<0.000000e+00> : vector<8xf32>
    %18 = vector.multi_reduction <add>, %17, %cst_9 [1] : vector<8x128xf32> to vector<8xf32>
    %19 = vector.shape_cast %18 : vector<8xf32> to vector<8x1xf32>
    %20 = math.log %19 : vector<8x1xf32>
    %21 = arith.addf %14, %20 : vector<8x1xf32>
    %c0_10 = arith.constant 0 : index
    %c0_11 = arith.constant 0 : index
    %22 = vector.load %arg4[%c0_10, %c0_11] : memref<8x1xi32, #tpu.memory_space<vmem>>, vector<8x1xi32>
    %23 = vector.broadcast %22 : vector<8x1xi32> to vector<8x128xi32>
    %24 = arith.cmpi eq, %8, %23 : vector<8x128xi32>
    %cst_12 = arith.constant 0.000000e+00 : f32
    %25 = vector.broadcast %cst_12 : f32 to vector<8x128xf32>
    %26 = arith.select %24, %6, %25 : vector<8x128xi1>, vector<8x128xf32>
    %cst_13 = arith.constant dense<0.000000e+00> : vector<8xf32>
    %27 = vector.multi_reduction <add>, %26, %cst_13 [1] : vector<8x128xf32> to vector<8xf32>
    %28 = vector.shape_cast %27 : vector<8xf32> to vector<8x1xf32>
    %29 = arith.subf %21, %28 : vector<8x1xf32>
    %c0_14 = arith.constant 0 : index
    %c0_15 = arith.constant 0 : index
    %30 = vector.load %arg6[%c0_14, %c0_15] : memref<8x1xf32, #tpu.memory_space<vmem>>, vector<8x1xf32>
    tpu.vector_store %arg6[%c0_14, %c0_15], %29 {strides = array<i32>} : memref<8x1xf32, #tpu.memory_space<vmem>>, vector<8x1xf32>,
    return
  }
  func.func @transform_0(%arg0: i32) -> (i32, i32) {
    %c0_i32 = arith.constant 0 : i32
    %c0_i32_0 = arith.constant 0 : i32
    return %arg0, %c0_i32 : i32, i32
  }
  func.func @transform_1(%arg0: i32) -> (i32, i32) {
    %c0_i32 = arith.constant 0 : i32
    %c0_i32_0 = arith.constant 0 : i32
    %c0_i32_1 = arith.constant 0 : i32
    return %c0_i32, %c0_i32_0 : i32, i32
  }
  func.func @transform_2(%arg0: i32) -> (i32, i32) {
    %c0_i32 = arith.constant 0 : i32
    %c0_i32_0 = arith.constant 0 : i32
    %c0_i32_1 = arith.constant 0 : i32
    return %c0_i32, %c0_i32_0 : i32, i32
  }
  func.func @transform_3(%arg0: i32) -> (i32, i32) {
    %c0_i32 = arith.constant 0 : i32
    %c0_i32_0 = arith.constant 0 : i32
    return %arg0, %c0_i32 : i32, i32
  }
  func.func @transform_4(%arg0: i32) -> (i32, i32) {
    %c0_i32 = arith.constant 0 : i32
    %c0_i32_0 = arith.constant 0 : i32
    return %arg0, %c0_i32 : i32, i32
  }
  func.func @transform_5(%arg0: i32) -> (i32, i32) {
    %c0_i32 = arith.constant 0 : i32
    %c0_i32_0 = arith.constant 0 : i32
    return %arg0, %c0_i32 : i32, i32
  }
}

module attributes {stable_mosaic.version = 11 : i64} {
  func.func @_softmax_ce_resident_kernel(%arg0: i32, %arg1: memref<8x32xf32, #tpu.memory_space<vmem>>, %arg2: memref<32x128xbf16, #tpu.memory_space<vmem>>, %arg3: memref<1x128xf32, #tpu.memory_space<vmem>>, %arg4: memref<8x1xi32, #tpu.memory_space<vmem>>, %arg5: memref<8x128xf32, #tpu.memory_space<vmem>>, %arg6: memref<8x1xf32, #tpu.memory_space<vmem>>) attributes {dimension_semantics = [#tpu.dimension_semantics<parallel>], iteration_bounds = array<i64: 1>, scalar_prefetch = 0 : i64, scratch_operands = 0 : i64, tpu.core_type = #tpu.core_type<tc>, window_params = [{transform_indices = @transform_0, window_bounds = array<i64: 8, 32>}, {pipeline_mode = #tpu.pipeline_mode<synchronous>, transform_indices = @transform_1, window_bounds = array<i64: 32, 128>}, {pipeline_mode = #tpu.pipeline_mode<synchronous>, transform_indices = @transform_2, window_bounds = array<i64: 1, 128>}, {transform_indices = @transform_3, window_bounds = array<i64: 8, 1>}, {transform_indices = @transform_4, window_bounds = array<i64: 8, 128>}, {transform_indices = @transform_5, window_bounds = array<i64: 8, 1>}]} {
    %c0 = arith.constant 0 : index
    %c0_0 = arith.constant 0 : index
    %0 = vector.load %arg1[%c0, %c0_0] : memref<8x32xf32, #tpu.memory_space<vmem>>, vector<8x32xf32>
    %1 = arith.truncf %0 : vector<8x32xf32> to vector<8x32xbf16>
    %c0_1 = arith.constant 0 : index
    %c0_2 = arith.constant 0 : index
    %2 = vector.load %arg2[%c0_1, %c0_2] : memref<32x128xbf16, #tpu.memory_space<vmem>>, vector<32x128xbf16>
    %cst = arith.constant dense<0.000000e+00> : vector<8x128xf32>
    %3 = tpu.matmul %1, %2, %cst {dimension_numbers = #tpu.dot_dimension_numbers<[1], [0], [0], [1], [0, 0, 1, 1], [], []>} : vector<8x32xbf16>, vector<32x128xbf16>, vector<8x128xf32> -> vector<8x128xf32>
    %c0_3 = arith.constant 0 : index
    %c0_4 = arith.constant 0 : index
    %4 = vector.load %arg3[%c0_3, %c0_4] : memref<1x128xf32, #tpu.memory_space<vmem>>, vector<1x128xf32>
    %5 = vector.broadcast %4 : vector<1x128xf32> to vector<8x128xf32>
    %6 = arith.addf %3, %5 : vector<8x128xf32>
    %c0_5 = arith.constant 0 : index
    %c0_6 = arith.constant 0 : index
    %7 = vector.load %arg5[%c0_5, %c0_6] : memref<8x128xf32, #tpu.memory_space<vmem>>, vector<8x128xf32>
    tpu.vector_store %arg5[%c0_5, %c0_6], %6 {strides = array<i32>} : memref<8x128xf32, #tpu.memory_space<vmem>>, vector<8x128xf32>,
    %8 = tpu.iota {dimensions = array<i32: 1>} : vector<8x128xi32>
    %c16_i32 = arith.constant 16 : i32
    %9 = vector.broadcast %c16_i32 : i32 to vector<8x128xi32>
    %10 = arith.cmpi slt, %8, %9 : vector<8x128xi32>
    %cst_7 = arith.constant 0xFF800000 : f32
    %11 = vector.broadcast %cst_7 : f32 to vector<8x128xf32>
    %12 = arith.select %10, %6, %11 : vector<8x128xi1>, vector<8x128xf32>
    %cst_8 = arith.constant dense<0xFF800000> : vector<8xf32>
    %13 = vector.multi_reduction <maximumf>, %12, %cst_8 [1] : vector<8x128xf32> to vector<8xf32>
    %14 = vector.shape_cast %13 : vector<8xf32> to vector<8x1xf32>
    %15 = vector.broadcast %14 : vector<8x1xf32> to vector<8x128xf32>
    %16 = arith.subf %12, %15 : vector<8x128xf32>
    %17 = math.exp %16 : vector<8x128xf32>
    %cst_9 = arith.constant dense<0.000000e+00> : vector<8xf32>
    %18 = vector.multi_reduction <add>, %17, %cst_9 [1] : vector<8x128xf32> to vector<8xf32>
    %19 = vector.shape_cast %18 : vector<8xf32> to vector<8x1xf32>
    %20 = math.log %19 : vector<8x1xf32>
    %21 = arith.addf %14, %20 : vector<8x1xf32>
    %c0_10 = arith.constant 0 : index
    %c0_11 = arith.constant 0 : index
    %22 = vector.load %arg4[%c0_10, %c0_11] : memref<8x1xi32, #tpu.memory_space<vmem>>, vector<8x1xi32>
    %23 = vector.broadcast %22 : vector<8x1xi32> to vector<8x128xi32>
    %24 = arith.cmpi eq, %8, %23 : vector<8x128xi32>
    %cst_12 = arith.constant 0.000000e+00 : f32
    %25 = vector.broadcast %cst_12 : f32 to vector<8x128xf32>
    %26 = arith.select %24, %6, %25 : vector<8x128xi1>, vector<8x128xf32>
    %cst_13 = arith.constant dense<0.000000e+00> : vector<8xf32>
    %27 = vector.multi_reduction <add>, %26, %cst_13 [1] : vector<8x128xf32> to vector<8xf32>
    %28 = vector.shape_cast %27 : vector<8xf32> to vector<8x1xf32>
    %29 = arith.subf %21, %28 : vector<8x1xf32>
    %c0_14 = arith.constant 0 : index
    %c0_15 = arith.constant 0 : index
    %30 = vector.load %arg6[%c0_14, %c0_15] : memref<8x1xf32, #tpu.memory_space<vmem>>, vector<8x1xf32>
    tpu.vector_store %arg6[%c0_14, %c0_15], %29 {strides = array<i32>} : memref<8x1xf32, #tpu.memory_space<vmem>>, vector<8x1xf32>,
    return
  }
  func.func @transform_0(%arg0: i32) -> (i32, i32) {
    %c0_i32 = arith.constant 0 : i32
    %c0_i32_0 = arith.constant 0 : i32
    return %arg0, %c0_i32 : i32, i32
  }
  func.func @transform_1(%arg0: i32) -> (i32, i32) {
    %c0_i32 = arith.constant 0 : i32
    %c0_i32_0 = arith.constant 0 : i32
    %c0_i32_1 = arith.constant 0 : i32
    return %c0_i32, %c0_i32_0 : i32, i32
  }
  func.func @transform_2(%arg0: i32) -> (i32, i32) {
    %c0_i32 = arith.constant 0 : i32
    %c0_i32_0 = arith.constant 0 : i32
    %c0_i32_1 = arith.constant 0 : i32
    return %c0_i32, %c0_i32_0 : i32, i32
  }
  func.func @transform_3(%arg0: i32) -> (i32, i32) {
    %c0_i32 = arith.constant 0 : i32
    %c0_i32_0 = arith.constant 0 : i32
    return %arg0, %c0_i32 : i32, i32
  }
  func.func @transform_4(%arg0: i32) -> (i32, i32) {
    %c0_i32 = arith.constant 0 : i32
    %c0_i32_0 = arith.constant 0 : i32
    return %arg0, %c0_i32 : i32, i32
  }
  func.func @transform_5(%arg0: i32) -> (i32, i32) {
    %c0_i32 = arith.constant 0 : i32
    %c0_i32_0 = arith.constant 0 : i32
    return %arg0, %c0_i32 : i32, i32
  }
}

</mosaic_0001>

<llo_original>
// kernel: tpu_custom_call.1
$region0: #{tpu_custom_call.1}
  #allocation0 [shape = 'u32[]', space=smem, size = 0x4, offset = 0x4, fixed_abs, tag = 'smem constant byte address 0x4 - core index']
  #allocation1 [shape = 'u32[144,128]{1,0:T(1,128)}', space=vmem, size = 0x12000, scoped, tag = 'internal scratch']
  %s0 = inlined_call_operand.hbm [shape: f32[8,32], index: 0, kind: input, shape index: {}]
  %s1 = inlined_call_operand.hbm [shape: bf16[32,128], index: 1, kind: input, shape index: {}]
  %s2 = inlined_call_operand.hbm [shape: f32[1,128], index: 2, kind: input, shape index: {}]
  %s3 = inlined_call_operand.hbm [shape: s32[8,1], index: 3, kind: input, shape index: {}]
  %s4 = inlined_call_operand.hbm [shape: f32[8,128], index: 4, kind: output, shape index: {0}]
  %s5 = inlined_call_operand.hbm [shape: f32[8,1], index: 5, kind: output, shape index: {1}]
  %6 = xla_tuple %s4, %s5
  %s7 = sld [smem:[#allocation0]]
  $region50: #{tpu_custom_call.1} parent=0
    _
  %s9 = ssub.s32 1, %s7
  %s10 = scalar_select 0, %s9, %s7
  $region1: #{tpu_custom_call.1} parent=0
    #allocation2 [shape = 'u8[4096]{0}', space=vmem, size = 0x1000, scoped, tag = 'input window, operand 0, single buffered']
    #allocation3 [shape = 's32[1]{0}', space=sflag, size = 0x4, scoped, tag = 'scoped memory for tpu_custom_call.1']
    #allocation4 [shape = 's32[1]{0}', space=sflag, size = 0x4, scoped, tag = 'scoped memory for tpu_custom_call.1']
    #allocation5 [shape = 'u8[8192]{0}', space=vmem, size = 0x2000, scoped, tag = 'input window, operand 1, single buffered']
    #allocation6 [shape = 's32[1]{0}', space=sflag, size = 0x4, scoped, tag = 'scoped memory for tpu_custom_call.1']
    #allocation7 [shape = 'u8[512]{0}', space=vmem, size = 0x400, scoped, tag = 'input window, operand 2, single buffered']
    #allocation8 [shape = 'u8[4096]{0}', space=vmem, size = 0x1000, scoped, tag = 'input window, operand 3, single buffered']
    #allocation9 [shape = 's32[1]{0}', space=sflag, size = 0x4, scoped, tag = 'scoped memory for tpu_custom_call.1']
    #allocation10 [shape = 'u8[4096]{0}', space=vmem, size = 0x1000, scoped, tag = 'output window, operand 0, single buffered']
    #allocation11 [shape = 'u8[4096]{0}', space=vmem, size = 0x1000, scoped, tag = 'output window, operand 1, single buffered']
    #allocation12 [shape = 's32[1]{0}', space=sflag, size = 0x4, scoped, tag = 'scoped memory for tpu_custom_call.1']
    %11 = vsyncpa [#allocation3], 0
    %12 = vsyncpa [#allocation6], 0
    %13 = vsyncpa [#allocation9], 0
    %14 = vsyncpa [#allocation4], 0
    %15 = vsyncpa [#allocation12], 0
    // Predicated region
    $region2: #{tpu_custom_call.1} parent=1 // pred_check
      _
    $region3: #{tpu_custom_call.1} parent=1 // pred_check_branch
      %17 = sbr.rel (0) target = $region5
    $region4: #{tpu_custom_call.1} parent=1 // pred_region
      %s19 = ssub.s32 128, 128
      %20 = vsyncadd [#allocation3], %s19
      %s22 = sshll.u32 [#allocation2], 4
      %s23 = int_to_ptr.vmem [resolvable:$true] %s22
      %25 = dma.hbm_to_vmem [thread:$0]  %s0, 128, %s23, [#allocation3]
    $region5: #{tpu_custom_call.1} parent=1 // pred_fallthru
      _
    // Predicated region
    $region6: #{tpu_custom_call.1} parent=1 // pred_check
      _
    $region7: #{tpu_custom_call.1} parent=1 // pred_check_branch
      %27 = sbr.rel (0) target = $region9
    $region8: #{tpu_custom_call.1} parent=1 // pred_region
      %s29 = ssub.s32 256, 256
      %30 = vsyncadd [#allocation6], %s29
      %s31 = sshll.u32 [#allocation5], 4
      %s32 = int_to_ptr.vmem [resolvable:$true] %s31
      %37 = dma.hbm_to_vmem [thread:$0]  %s1, 256, %s32, [#allocation6], 64, 64, 4
    $region9: #{tpu_custom_call.1} parent=1 // pred_fallthru
      _
    // Predicated region
    $region10: #{tpu_custom_call.1} parent=1 // pred_check
      _
    $region11: #{tpu_custom_call.1} parent=1 // pred_check_branch
      %39 = sbr.rel (0) target = $region13
    $region12: #{tpu_custom_call.1} parent=1 // pred_region
      %s41 = ssub.s32 16, 16
      %42 = vsyncadd [#allocation6], %s41
      %s44 = sshll.u32 [#allocation7], 4
      %s45 = int_to_ptr.vmem [resolvable:$true] %s44
      %47 = dma.hbm_to_vmem [thread:$0]  %s2, 16, %s45, [#allocation6]
    $region13: #{tpu_custom_call.1} parent=1 // pred_fallthru
      _
    // Predicated region
    $region14: #{tpu_custom_call.1} parent=1 // pred_check
      _
    $region15: #{tpu_custom_call.1} parent=1 // pred_check_branch
      %49 = sbr.rel (0) target = $region17
    $region16: #{tpu_custom_call.1} parent=1 // pred_region
      %s51 = ssub.s32 128, 128
      %52 = vsyncadd [#allocation9], %s51
      %s54 = sshll.u32 [#allocation8], 4
      %s55 = int_to_ptr.vmem [resolvable:$true] %s54
      %57 = dma.hbm_to_vmem [thread:$0]  %s3, 128, %s55, [#allocation9]
    $region17: #{tpu_custom_call.1} parent=1 // pred_fallthru
      _
    // Predicated region
    $region18: #{tpu_custom_call.1} parent=1 // pred_check
      _
    $region19: #{tpu_custom_call.1} parent=1 // pred_check_branch
      %59 = sbr.rel (0) target = $region21
    $region20: #{tpu_custom_call.1} parent=1 // pred_region
      %60 = dma.done [#allocation3], 128
    $region21: #{tpu_custom_call.1} parent=1 // pred_fallthru
      _
    // Predicated region
    $region22: #{tpu_custom_call.1} parent=1 // pred_check
      _
    $region23: #{tpu_custom_call.1} parent=1 // pred_check_branch
      %62 = sbr.rel (0) target = $region25
    $region24: #{tpu_custom_call.1} parent=1 // pred_region
      %63 = dma.done [#allocation6], 256
    $region25: #{tpu_custom_call.1} parent=1 // pred_fallthru
      _
    // Predicated region
    $region26: #{tpu_custom_call.1} parent=1 // pred_check
      _
    $region27: #{tpu_custom_call.1} parent=1 // pred_check_branch
      %65 = sbr.rel (0) target = $region29
    $region28: #{tpu_custom_call.1} parent=1 // pred_region
      %66 = dma.done [#allocation6], 16
    $region29: #{tpu_custom_call.1} parent=1 // pred_fallthru
      _
    // Predicated region
    $region30: #{tpu_custom_call.1} parent=1 // pred_check
      _
    $region31: #{tpu_custom_call.1} parent=1 // pred_check_branch
      %68 = sbr.rel (0) target = $region33
    $region32: #{tpu_custom_call.1} parent=1 // pred_region
      %69 = dma.done [#allocation9], 128
    $region33: #{tpu_custom_call.1} parent=1 // pred_fallthru
      _
    %v71 = vld [vmem:[#allocation2] sm:$0xff]
    %v72 = vpack.c.bf16 %v71, %v71
    %v73 = vld [vmem:[#allocation5] sm:$0xf]
    %v74 = vld [vmem:[#allocation5 + $0x4] sm:$0xf]
    %v75 = vld [vmem:[#allocation5 + $0x8] sm:$0xf]
    %v76 = vld [vmem:[#allocation5 + $0xc] sm:$0xf]
    %v77 = vld [vmem:[#allocation7] sm:$0x1]
    %v79 = vlaneseq
    %v80 = vshrl.u32 %v79, 7
    %v81 = vsub.s32 0, %v80
    %v82 = vrot.slane %v77, %v81
    %v88 = vunpack.c.l.b16 %v73
    %v89 = vunpack.c.l.b16 %v74
    %v90 = vunpack.c.l.b16 %v75
    %v91 = vunpack.c.l.b16 %v76
    %v92 = vpack.c.b16 %v89, %v88
    %v93 = vpack.c.b16 %v91, %v90
    %vm96 = vcmask 261120
    %v98 = vsel %vm96, %v72, 0
    %100 = vmatprep.subr.bf16.mxu0 0
    %101 = vmatpush1.bf16.msra.mxu0 %v92
    %102 = vmatprep.subr.bf16.mxu0 0
    %103 = vmatpush1.bf16.msra.mxu0 %v93
    %104 = vmatprep.subr.bf16.mxu0 0
    %105 = vmatpush1.bf16.msra.mxu0 0
    %106 = vmatprep.subr.bf16.mxu0 0
    %107 = vmatpush1.bf16.msra.mxu0 0
    %108 = vmatprep.subr.bf16.mxu0 0
    %109 = vmatpush1.bf16.msra.mxu0 0
    %110 = vmatprep.subr.bf16.mxu0 0
    %111 = vmatpush1.bf16.msra.mxu0 0
    %112 = vmatprep.subr.bf16.mxu0 0
    %113 = vmatpush1.bf16.msra.mxu0 0
    %114 = vmatprep.subr.bf16.mxu0 0
    %115 = vmatpush1.bf16.msra.mxu0 0
    %116 = vmatprep.subr.bf16.mxu0 0
    %117 = vmatpush1.bf16.msra.mxu0 0
    %118 = vmatprep.subr.bf16.mxu0 0
    %119 = vmatpush1.bf16.msra.mxu0 0
    %120 = vmatprep.subr.bf16.mxu0 0
    %121 = vmatpush1.bf16.msra.mxu0 0
    %122 = vmatprep.subr.bf16.mxu0 0
    %123 = vmatpush1.bf16.msra.mxu0 0
    %124 = vmatprep.subr.bf16.mxu0 0
    %125 = vmatpush1.bf16.msra.mxu0 0
    %126 = vmatprep.subr.bf16.mxu0 0
    %127 = vmatpush1.bf16.msra.mxu0 0
    %128 = vmatprep.subr.bf16.mxu0 0
    %129 = vmatpush1.bf16.msra.mxu0 0
    %130 = vmatprep.subr.bf16.mxu0 0
    %131 = vmatpush1.bf16.msra.mxu0 0
    %132 = vmatprep.mubr.bf16.mxu0 0
    %133 = vmatmul.mubr.bf16.gmra.mrb[0].mxu0 %v98
    %v134 = vpop.f32.mrb[0].mxu0
    %v135 = vadd.f32 %v82, %v134
    %v136 = vpop.f32.mrb[0].mxu0
    %v137 = vpop.f32.mrb[0].mxu0
    %v138 = vpop.f32.mrb[0].mxu0
    %139 = vdwg.mxu0
    %140 = vst [vmem:[#allocation10] sm:$0xff] %v135
    %v141 = vlaneseq
    %v142 = vand.u32 %v141, 127
    %vm143 = vcmp.lt.s32.totalorder %v142, 16
    %v144 = vsel %vm143, %v135, -inf
    %145 = vmax.xlane.f32.xlu0 %v144
    %v146 = vpop.xlane.xlu0 %145
    %v147 = vsub.f32 %v144, %v146
    %v148 = vmul.f32 %v147, 1.442695
    %v149 = vpow.pop %v148
    %150 = vadd.xlane.f32.xlu0 %v149
    %v151 = vpop.xlane.xlu0 %150
    %v152 = vlog2.pop %v151
    %v153 = vmul.f32 %v152, 0.6931472
    %v154 = vadd.f32 %v146, %v153
    %v155 = vld [vmem:[#allocation8] sm:$0xff]
    %156 = vset.pattern.permute.xlu0 0
    %157 = vperm.xlu0 %156, %v155
    %v158 = vpop.permute.xlu0 %157
    %vm159 = vcmp.eq.s32.totalorder %v142, %v158
    %v160 = vsel %vm159, %v135, 0.0
    %161 = vadd.xlane.f32.xlu0 %v160
    %v162 = vpop.xlane.xlu0 %161
    %v163 = vsub.f32 %v154, %v162
    %vm164 = vcmask 7168
    %165 = vst.msk [vmem:[#allocation11] sm:$0xff] %vm164, %v163
    // Predicated region
    $region34: #{tpu_custom_call.1} parent=1 // pred_check
      _
    $region35: #{tpu_custom_call.1} parent=1 // pred_check_branch
      %167 = sbr.rel (0) target = $region37
    $region36: #{tpu_custom_call.1} parent=1 // pred_region
      %s169 = ssub.s32 128, 128
      %170 = vsyncadd [#allocation4], %s169
      %s172 = sshll.u32 [#allocation10], 4
      %s173 = int_to_ptr.vmem [resolvable:$true] %s172
      %175 = dma.vmem_to_hbm [thread:$0]  %s173, 128, %s4, [#allocation4]
    $region37: #{tpu_custom_call.1} parent=1 // pred_fallthru
      _
    // Predicated region
    $region38: #{tpu_custom_call.1} parent=1 // pred_check
      _
    $region39: #{tpu_custom_call.1} parent=1 // pred_check_branch
      %177 = sbr.rel (0) target = $region41
    $region40: #{tpu_custom_call.1} parent=1 // pred_region
      %s179 = ssub.s32 128, 128
      %180 = vsyncadd [#allocation12], %s179
      %s182 = sshll.u32 [#allocation11], 4
      %s183 = int_to_ptr.vmem [resolvable:$true] %s182
      %185 = dma.vmem_to_hbm [thread:$0]  %s183, 128, %s5, [#allocation12]
    $region41: #{tpu_custom_call.1} parent=1 // pred_fallthru
      _
    // Predicated region
    $region42: #{tpu_custom_call.1} parent=1 // pred_check
      _
    $region43: #{tpu_custom_call.1} parent=1 // pred_check_branch
      %187 = sbr.rel (0) target = $region45
    $region44: #{tpu_custom_call.1} parent=1 // pred_region
      %188 = dma.done [#allocation4], 128
    $region45: #{tpu_custom_call.1} parent=1 // pred_fallthru
      _
    // Predicated region
    $region46: #{tpu_custom_call.1} parent=1 // pred_check
      _
    $region47: #{tpu_custom_call.1} parent=1 // pred_check_branch
      %190 = sbr.rel (0) target = $region49
    $region48: #{tpu_custom_call.1} parent=1 // pred_region
      %191 = dma.done [#allocation12], 128
    $region49: #{tpu_custom_call.1} parent=1 // pred_fallthru
      _
    %192 = vsyncpa [#allocation3], 1
    %193 = vsyncpa [#allocation6], 1
    %194 = vsyncpa [#allocation9], 1
    %195 = vsyncpa [#allocation4], 1
    %196 = vsyncpa [#allocation12], 1

// kernel: tpu_custom_call.1
$region0: #{tpu_custom_call.1}
  #allocation0 [shape = 'u32[]', space=smem, size = 0x4, offset = 0x4, fixed_abs, tag = 'smem constant byte address 0x4 - core index']
  #allocation1 [shape = 'u32[144,128]{1,0:T(1,128)}', space=vmem, size = 0x12000, scoped, tag = 'internal scratch']
  %s0 = inlined_call_operand.hbm [shape: f32[8,32], index: 0, kind: input, shape index: {}]
  %s1 = inlined_call_operand.hbm [shape: bf16[32,128], index: 1, kind: input, shape index: {}]
  %s2 = inlined_call_operand.hbm [shape: f32[1,128], index: 2, kind: input, shape index: {}]
  %s3 = inlined_call_operand.hbm [shape: s32[8,1], index: 3, kind: input, shape index: {}]
  %s4 = inlined_call_operand.hbm [shape: f32[8,128], index: 4, kind: output, shape index: {0}]
  %s5 = inlined_call_operand.hbm [shape: f32[8,1], index: 5, kind: output, shape index: {1}]
  %6 = xla_tuple %s4, %s5
  %s7 = sld [smem:[#allocation0]]
  $region50: #{tpu_custom_call.1} parent=0
    _
  %s9 = ssub.s32 1, %s7
  %s10 = scalar_select 0, %s9, %s7
  $region1: #{tpu_custom_call.1} parent=0
    #allocation2 [shape = 'u8[4096]{0}', space=vmem, size = 0x1000, scoped, tag = 'input window, operand 0, single buffered']
    #allocation3 [shape = 's32[1]{0}', space=sflag, size = 0x4, scoped, tag = 'scoped memory for tpu_custom_call.1']
    #allocation4 [shape = 's32[1]{0}', space=sflag, size = 0x4, scoped, tag = 'scoped memory for tpu_custom_call.1']
    #allocation5 [shape = 'u8[8192]{0}', space=vmem, size = 0x2000, scoped, tag = 'input window, operand 1, single buffered']
    #allocation6 [shape = 's32[1]{0}', space=sflag, size = 0x4, scoped, tag = 'scoped memory for tpu_custom_call.1']
    #allocation7 [shape = 'u8[512]{0}', space=vmem, size = 0x400, scoped, tag = 'input window, operand 2, single buffered']
    #allocation8 [shape = 'u8[4096]{0}', space=vmem, size = 0x1000, scoped, tag = 'input window, operand 3, single buffered']
    #allocation9 [shape = 's32[1]{0}', space=sflag, size = 0x4, scoped, tag = 'scoped memory for tpu_custom_call.1']
    #allocation10 [shape = 'u8[4096]{0}', space=vmem, size = 0x1000, scoped, tag = 'output window, operand 0, single buffered']
    #allocation11 [shape = 'u8[4096]{0}', space=vmem, size = 0x1000, scoped, tag = 'output window, operand 1, single buffered']
    #allocation12 [shape = 's32[1]{0}', space=sflag, size = 0x4, scoped, tag = 'scoped memory for tpu_custom_call.1']
    %11 = vsyncpa [#allocation3], 0
    %12 = vsyncpa [#allocation6], 0
    %13 = vsyncpa [#allocation9], 0
    %14 = vsyncpa [#allocation4], 0
    %15 = vsyncpa [#allocation12], 0
    // Predicated region
    $region2: #{tpu_custom_call.1} parent=1 // pred_check
      _
    $region3: #{tpu_custom_call.1} parent=1 // pred_check_branch
      %17 = sbr.rel (0) target = $region5
    $region4: #{tpu_custom_call.1} parent=1 // pred_region
      %s19 = ssub.s32 128, 128
      %20 = vsyncadd [#allocation3], %s19
      %s22 = sshll.u32 [#allocation2], 4
      %s23 = int_to_ptr.vmem [resolvable:$true] %s22
      %25 = dma.hbm_to_vmem [thread:$0]  %s0, 128, %s23, [#allocation3]
    $region5: #{tpu_custom_call.1} parent=1 // pred_fallthru
      _
    // Predicated region
    $region6: #{tpu_custom_call.1} parent=1 // pred_check
      _
    $region7: #{tpu_custom_call.1} parent=1 // pred_check_branch
      %27 = sbr.rel (0) target = $region9
    $region8: #{tpu_custom_call.1} parent=1 // pred_region
      %s29 = ssub.s32 256, 256
      %30 = vsyncadd [#allocation6], %s29
      %s31 = sshll.u32 [#allocation5], 4
      %s32 = int_to_ptr.vmem [resolvable:$true] %s31
      %37 = dma.hbm_to_vmem [thread:$0]  %s1, 256, %s32, [#allocation6], 64, 64, 4
    $region9: #{tpu_custom_call.1} parent=1 // pred_fallthru
      _
    // Predicated region
    $region10: #{tpu_custom_call.1} parent=1 // pred_check
      _
    $region11: #{tpu_custom_call.1} parent=1 // pred_check_branch
      %39 = sbr.rel (0) target = $region13
    $region12: #{tpu_custom_call.1} parent=1 // pred_region
      %s41 = ssub.s32 16, 16
      %42 = vsyncadd [#allocation6], %s41
      %s44 = sshll.u32 [#allocation7], 4
      %s45 = int_to_ptr.vmem [resolvable:$true] %s44
      %47 = dma.hbm_to_vmem [thread:$0]  %s2, 16, %s45, [#allocation6]
    $region13: #{tpu_custom_call.1} parent=1 // pred_fallthru
      _
    // Predicated region
    $region14: #{tpu_custom_call.1} parent=1 // pred_check
      _
    $region15: #{tpu_custom_call.1} parent=1 // pred_check_branch
      %49 = sbr.rel (0) target = $region17
    $region16: #{tpu_custom_call.1} parent=1 // pred_region
      %s51 = ssub.s32 128, 128
      %52 = vsyncadd [#allocation9], %s51
      %s54 = sshll.u32 [#allocation8], 4
      %s55 = int_to_ptr.vmem [resolvable:$true] %s54
      %57 = dma.hbm_to_vmem [thread:$0]  %s3, 128, %s55, [#allocation9]
    $region17: #{tpu_custom_call.1} parent=1 // pred_fallthru
      _
    // Predicated region
    $region18: #{tpu_custom_call.1} parent=1 // pred_check
      _
    $region19: #{tpu_custom_call.1} parent=1 // pred_check_branch
      %59 = sbr.rel (0) target = $region21
    $region20: #{tpu_custom_call.1} parent=1 // pred_region
      %60 = dma.done [#allocation3], 128
    $region21: #{tpu_custom_call.1} parent=1 // pred_fallthru
      _
    // Predicated region
    $region22: #{tpu_custom_call.1} parent=1 // pred_check
      _
    $region23: #{tpu_custom_call.1} parent=1 // pred_check_branch
      %62 = sbr.rel (0) target = $region25
    $region24: #{tpu_custom_call.1} parent=1 // pred_region
      %63 = dma.done [#allocation6], 256
    $region25: #{tpu_custom_call.1} parent=1 // pred_fallthru
      _
    // Predicated region
    $region26: #{tpu_custom_call.1} parent=1 // pred_check
      _
    $region27: #{tpu_custom_call.1} parent=1 // pred_check_branch
      %65 = sbr.rel (0) target = $region29
    $region28: #{tpu_custom_call.1} parent=1 // pred_region
      %66 = dma.done [#allocation6], 16
    $region29: #{tpu_custom_call.1} parent=1 // pred_fallthru
      _
    // Predicated region
    $region30: #{tpu_custom_call.1} parent=1 // pred_check
      _
    $region31: #{tpu_custom_call.1} parent=1 // pred_check_branch
      %68 = sbr.rel (0) target = $region33
    $region32: #{tpu_custom_call.1} parent=1 // pred_region
      %69 = dma.done [#allocation9], 128
    $region33: #{tpu_custom_call.1} parent=1 // pred_fallthru
      _
    %v71 = vld [vmem:[#allocation2] sm:$0xff]
    %v72 = vpack.c.bf16 %v71, %v71
    %v73 = vld [vmem:[#allocation5] sm:$0xf]
    %v74 = vld [vmem:[#allocation5 + $0x4] sm:$0xf]
    %v75 = vld [vmem:[#allocation5 + $0x8] sm:$0xf]
    %v76 = vld [vmem:[#allocation5 + $0xc] sm:$0xf]
    %v77 = vld [vmem:[#allocation7] sm:$0x1]
    %v79 = vlaneseq
    %v80 = vshrl.u32 %v79, 7
    %v81 = vsub.s32 0, %v80
    %v82 = vrot.slane %v77, %v81
    %v88 = vunpack.c.l.b16 %v73
    %v89 = vunpack.c.l.b16 %v74
    %v90 = vunpack.c.l.b16 %v75
    %v91 = vunpack.c.l.b16 %v76
    %v92 = vpack.c.b16 %v89, %v88
    %v93 = vpack.c.b16 %v91, %v90
    %vm96 = vcmask 261120
    %v98 = vsel %vm96, %v72, 0
    %100 = vmatprep.subr.bf16.mxu0 0
    %101 = vmatpush1.bf16.msra.mxu0 %v92
    %102 = vmatprep.subr.bf16.mxu0 0
    %103 = vmatpush1.bf16.msra.mxu0 %v93
    %104 = vmatprep.subr.bf16.mxu0 0
    %105 = vmatpush1.bf16.msra.mxu0 0
    %106 = vmatprep.subr.bf16.mxu0 0
    %107 = vmatpush1.bf16.msra.mxu0 0
    %108 = vmatprep.subr.bf16.mxu0 0
    %109 = vmatpush1.bf16.msra.mxu0 0
    %110 = vmatprep.subr.bf16.mxu0 0
    %111 = vmatpush1.bf16.msra.mxu0 0
    %112 = vmatprep.subr.bf16.mxu0 0
    %113 = vmatpush1.bf16.msra.mxu0 0
    %114 = vmatprep.subr.bf16.mxu0 0
    %115 = vmatpush1.bf16.msra.mxu0 0
    %116 = vmatprep.subr.bf16.mxu0 0
    %117 = vmatpush1.bf16.msra.mxu0 0
    %118 = vmatprep.subr.bf16.mxu0 0
    %119 = vmatpush1.bf16.msra.mxu0 0
    %120 = vmatprep.subr.bf16.mxu0 0
    %121 = vmatpush1.bf16.msra.mxu0 0
    %122 = vmatprep.subr.bf16.mxu0 0
    %123 = vmatpush1.bf16.msra.mxu0 0
    %124 = vmatprep.subr.bf16.mxu0 0
    %125 = vmatpush1.bf16.msra.mxu0 0
    %126 = vmatprep.subr.bf16.mxu0 0
    %127 = vmatpush1.bf16.msra.mxu0 0
    %128 = vmatprep.subr.bf16.mxu0 0
    %129 = vmatpush1.bf16.msra.mxu0 0
    %130 = vmatprep.subr.bf16.mxu0 0
    %131 = vmatpush1.bf16.msra.mxu0 0
    %132 = vmatprep.mubr.bf16.mxu0 0
    %133 = vmatmul.mubr.bf16.gmra.mrb[0].mxu0 %v98
    %v134 = vpop.f32.mrb[0].mxu0
    %v135 = vadd.f32 %v82, %v134
    %v136 = vpop.f32.mrb[0].mxu0
    %v137 = vpop.f32.mrb[0].mxu0
    %v138 = vpop.f32.mrb[0].mxu0
    %139 = vdwg.mxu0
    %140 = vst [vmem:[#allocation10] sm:$0xff] %v135
    %v141 = vlaneseq
    %v142 = vand.u32 %v141, 127
    %vm143 = vcmp.lt.s32.totalorder %v142, 16
    %v144 = vsel %vm143, %v135, -inf
    %145 = vmax.xlane.f32.xlu0 %v144
    %v146 = vpop.xlane.xlu0 %145
    %v147 = vsub.f32 %v144, %v146
    %v148 = vmul.f32 %v147, 1.442695
    %v149 = vpow.pop %v148
    %150 = vadd.xlane.f32.xlu0 %v149
    %v151 = vpop.xlane.xlu0 %150
    %v152 = vlog2.pop %v151
    %v153 = vmul.f32 %v152, 0.6931472
    %v154 = vadd.f32 %v146, %v153
    %v155 = vld [vmem:[#allocation8] sm:$0xff]
    %156 = vset.pattern.permute.xlu0 0
    %157 = vperm.xlu0 %156, %v155
    %v158 = vpop.permute.xlu0 %157
    %vm159 = vcmp.eq.s32.totalorder %v142, %v158
    %v160 = vsel %vm159, %v135, 0.0
    %161 = vadd.xlane.f32.xlu0 %v160
    %v162 = vpop.xlane.xlu0 %161
    %v163 = vsub.f32 %v154, %v162
    %vm164 = vcmask 7168
    %165 = vst.msk [vmem:[#allocation11] sm:$0xff] %vm164, %v163
    // Predicated region
    $region34: #{tpu_custom_call.1} parent=1 // pred_check
      _
    $region35: #{tpu_custom_call.1} parent=1 // pred_check_branch
      %167 = sbr.rel (0) target = $region37
    $region36: #{tpu_custom_call.1} parent=1 // pred_region
      %s169 = ssub.s32 128, 128
      %170 = vsyncadd [#allocation4], %s169
      %s172 = sshll.u32 [#allocation10], 4
      %s173 = int_to_ptr.vmem [resolvable:$true] %s172
      %175 = dma.vmem_to_hbm [thread:$0]  %s173, 128, %s4, [#allocation4]
    $region37: #{tpu_custom_call.1} parent=1 // pred_fallthru
      _
    // Predicated region
    $region38: #{tpu_custom_call.1} parent=1 // pred_check
      _
    $region39: #{tpu_custom_call.1} parent=1 // pred_check_branch
      %177 = sbr.rel (0) target = $region41
    $region40: #{tpu_custom_call.1} parent=1 // pred_region
      %s179 = ssub.s32 128, 128
      %180 = vsyncadd [#allocation12], %s179
      %s182 = sshll.u32 [#allocation11], 4
      %s183 = int_to_ptr.vmem [resolvable:$true] %s182
      %185 = dma.vmem_to_hbm [thread:$0]  %s183, 128, %s5, [#allocation12]
    $region41: #{tpu_custom_call.1} parent=1 // pred_fallthru
      _
    // Predicated region
    $region42: #{tpu_custom_call.1} parent=1 // pred_check
      _
    $region43: #{tpu_custom_call.1} parent=1 // pred_check_branch
      %187 = sbr.rel (0) target = $region45
    $region44: #{tpu_custom_call.1} parent=1 // pred_region
      %188 = dma.done [#allocation4], 128
    $region45: #{tpu_custom_call.1} parent=1 // pred_fallthru
      _
    // Predicated region
    $region46: #{tpu_custom_call.1} parent=1 // pred_check
      _
    $region47: #{tpu_custom_call.1} parent=1 // pred_check_branch
      %190 = sbr.rel (0) target = $region49
    $region48: #{tpu_custom_call.1} parent=1 // pred_region
      %191 = dma.done [#allocation12], 128
    $region49: #{tpu_custom_call.1} parent=1 // pred_fallthru
      _
    %192 = vsyncpa [#allocation3], 1
    %193 = vsyncpa [#allocation6], 1
    %194 = vsyncpa [#allocation9], 1
    %195 = vsyncpa [#allocation4], 1
    %196 = vsyncpa [#allocation12], 1

</llo_original>
